<compile_context>
chip_gen: v7x
topology: tpu7x:2x2x1
jax: 0.10.0
libtpu: 0.0.40
codegen_flags: <defaults>
</compile_context>

<pallas_src>
import jax
import jax.numpy as jnp
from jax.experimental import pallas as pl
from jax.experimental.pallas import tpu as pltpu


def _round_up(x, m):
    return ((x + m - 1) // m) * m


def _pick_tile(dim, cap, align):
    """Largest tile <= cap that divides `dim` and is a multiple of `align`
    (falls back to the full dimension, which BlockSpec always allows)."""
    if dim <= cap:
        return dim
    t = (cap // align) * align
    while t >= align:
        if dim % t == 0:
            return t
        t -= align
    return dim


# ----------------------------- Pallas kernels --------------------------------
def _xw_kernel(x_ref, w_ref, fw_ref):
    """fw2 = X_pad @ Wmat  (all relations' X @ W_r folded into one matmul)."""
    fw_ref[...] = jnp.dot(
        x_ref[...], w_ref[...], preferred_element_type=jnp.float32
    ).astype(fw_ref.dtype)


def _spmm_elu_kernel(adj_ref, fw_ref, out_ref):
    """out += adj_tile @ fw_tile; ELU fused on the last K step.

    The f32 output block is resident across the (innermost, "arbitrary") K axis
    and serves directly as the accumulator -- no separate VMEM scratch."""
    k = pl.program_id(2)

    @pl.when(k == 0)
    def _init():
        out_ref[...] = jnp.zeros_like(out_ref)

    out_ref[...] += jnp.dot(
        adj_ref[...], fw_ref[...], preferred_element_type=jnp.float32
    )

    @pl.when(k == pl.num_programs(2) - 1)
    def _finalize():
        y = out_ref[...]
        out_ref[...] = jnp.where(y > 0, y, jnp.expm1(y))   # F.elu, alpha=1


def _xw_matmul(x_pad, wmat):
    n, in_pad = x_pad.shape
    ncols = wmat.shape[1]
    tm = _pick_tile(n, 512, 8)
    tn = _pick_tile(ncols, 1024, 128)
    return pl.pallas_call(
        _xw_kernel,
        out_shape=jax.ShapeDtypeStruct((n, ncols), jnp.bfloat16),
        grid_spec=pltpu.PrefetchScalarGridSpec(
            num_scalar_prefetch=0,
            grid=(n // tm, ncols // tn),
            in_specs=[
                pl.BlockSpec((tm, in_pad), lambda i, j: (i, 0)),
                pl.BlockSpec((in_pad, tn), lambda i, j: (0, j)),
            ],
            out_specs=pl.BlockSpec((tm, tn), lambda i, j: (i, j)),
        ),
        compiler_params=pltpu.CompilerParams(
            dimension_semantics=("parallel", "parallel")),
    )(x_pad, wmat)


def _spmm_elu(adj_b, fw_stacked):
    n, k_total = adj_b.shape
    out_pad = fw_stacked.shape[1]
    tm = _pick_tile(n, 256, 8)          # fits v7x's tighter 64 MiB VMEM budget
    tn = _pick_tile(out_pad, 512, 128)  # lane-dense output stores
    tk = _pick_tile(k_total, 512, 128)
    return pl.pallas_call(
        _spmm_elu_kernel,
        out_shape=jax.ShapeDtypeStruct((n, out_pad), jnp.float32),
        grid_spec=pltpu.PrefetchScalarGridSpec(
            num_scalar_prefetch=0,
            grid=(n // tm, out_pad // tn, k_total // tk),
            in_specs=[
                pl.BlockSpec((tm, tk), lambda i, j, k: (i, k)),
                pl.BlockSpec((tk, tn), lambda i, j, k: (k, j)),
            ],
            out_specs=pl.BlockSpec((tm, tn), lambda i, j, k: (i, j)),
        ),
        compiler_params=pltpu.CompilerParams(
            dimension_semantics=("parallel", "parallel", "arbitrary")),
    )(adj_b, fw_stacked)


# ------------------------------ JAX glue --------------------------------------
def build_adj_values(triples, num_nodes, num_relations):
    """Reproduces generate_inverses / generate_self_loops / stack_matrices /
    sum_sparse of the reference (horizontal stacking, eval mode). Returns the
    COO entries (row, relation, object, value) of the normalised adjacency."""
    orig_rels = (num_relations - 1) // 2

    # inverse triples: (o, p + R0, s)
    inverse = jnp.stack(
        [triples[:, 2], triples[:, 1] + orig_rels, triples[:, 0]], axis=1)
    # self-loop triples: (i, 2*R0, i)
    node_ids = jnp.arange(num_nodes, dtype=triples.dtype)
    self_loops = jnp.stack(
        [node_ids, jnp.full((num_nodes,), 2 * orig_rels, triples.dtype), node_ids],
        axis=1)
    triples_plus = jnp.concatenate([triples, inverse, self_loops], axis=0)

    fr = triples_plus[:, 0]
    rel = triples_plus[:, 1]
    obj = triples_plus[:, 2]
    # module's horizontal-stacking column index: relation * n + object
    to = rel * num_nodes + obj

    # vals follow the reference source literally: object column cast to float.
    vals = obj.astype(jnp.float32)

    # sum_sparse with row_normalisation=False -> column sums of the (n, R*n)
    # matrix, gathered back per non-zero entry.
    col_sums = jnp.zeros((num_relations * num_nodes,), jnp.float32).at[to].add(vals)
    sums = col_sums[to]

    # not vertical_stacking: swap original / inverse sums, keep self-loop sums.
    n_e = triples.shape[0]
    n_sl = num_nodes
    sums = jnp.concatenate([sums[n_e:2 * n_e], sums[:n_e], sums[-n_sl:]], axis=0)
    vals = vals / sums   # 0/0 -> NaN, exactly as in the PyTorch source
    return fr, rel, obj, vals


def rgcn_rp_forward(triples, features, weights, num_nodes, num_relations):
    """ELU( adj @ stack_r(X @ W_r) )  with the module's adjacency semantics."""
    n, R = num_nodes, num_relations
    in_dim = features.shape[1]
    out_dim = weights.shape[2]
    in_pad = _round_up(in_dim, 128)    # full MXU K depth, unmasked lanes
    out_pad = _round_up(out_dim, 128)  # lane-dense output stores

    # Dense adjacency in relation-minor column order (col = object*R + rel) so
    # the stacked RHS below is a free reshape of fw2. Same nonzeros/values as
    # the module's (n, R*n) matrix, just a different flattening of (rel, obj).
    fr, rel, obj, vals = build_adj_values(triples, n, R)
    col = obj * R + rel
    adj = jnp.zeros((n, n * R), jnp.float32).at[fr, col].add(vals)
    adj_b = adj.astype(jnp.bfloat16)                     # halve adj HBM bytes

    # Zero-padded, bf16 operands. Wmat[i, r*out_pad + o] = W[r, i, o].
    x_pad = jnp.pad(features, ((0, 0), (0, in_pad - in_dim))).astype(jnp.bfloat16)
    w_pad = jnp.pad(weights,
                    ((0, 0), (0, in_pad - in_dim), (0, out_pad - out_dim)))
    wmat = jnp.transpose(w_pad, (1, 0, 2)).reshape(in_pad, R * out_pad)
    wmat = wmat.astype(jnp.bfloat16)

    # Kernel 1: fw2[m, r*out_pad + o] = sum_i X[m, i] * W[r, i, o]
    fw2 = _xw_matmul(x_pad, wmat)
    # Stacked RHS: row o*R + r  <->  (X @ W_r)[o, :]   (free, contiguous reshape)
    fw_stacked = fw2.reshape(n * R, out_pad)

    # Kernel 2: ELU(adj @ fw_stacked), resident f32 accumulation, fused ELU.
    out_padded = _spmm_elu(adj_b, fw_stacked)
    return out_padded[:, :out_dim]


# --------------------------------- main ---------------------------------------
if __name__ == "__main__":
    key = jax.random.PRNGKey(0)

    num_nodes = 16
    in_dim = 16          # in_features
    out_dim = 32         # out_features
    orig_rels = 3
    num_relations = 2 * orig_rels + 1   # forward + inverse + self-loop relation
    num_edges = 24

    k_s, k_p, k_o, k_f, k_w = jax.random.split(key, 5)
    subj = jax.random.randint(k_s, (num_edges,), 0, num_nodes, dtype=jnp.int32)
    prel = jax.random.randint(k_p, (num_edges,), 0, orig_rels, dtype=jnp.int32)
    obje = jax.random.randint(k_o, (num_edges,), 0, num_nodes, dtype=jnp.int32)
    triples = jnp.stack([subj, prel, obje], axis=1)

    features = jax.random.normal(k_f, (num_nodes, in_dim), jnp.float32)

    # self.weights: (num_relations, in_dim, out_dim), glorot-normal, gain=1
    # (PyTorch xavier_normal_ fans for a 3-D tensor: fan_in=in*out, fan_out=R*out)
    fan_in = in_dim * out_dim
    fan_out = num_relations * out_dim
    std = (2.0 / (fan_in + fan_out)) ** 0.5
    weights = std * jax.random.normal(
        k_w, (num_relations, in_dim, out_dim), jnp.float32)

    out = rgcn_rp_forward(triples, features, weights, num_nodes, num_relations)
    out = jax.block_until_ready(out)
    assert out.shape == (num_nodes, out_dim)

    # Pure-JAX reference of the module's forward, built in the module's own
    # (n, R*n) layout (cross-checks the relation-minor reordering), using the
    # same bf16 quantisation points as the kernel path.
    fr2, rel2, obj2, vals2 = build_adj_values(triples, num_nodes, num_relations)
    to2 = rel2 * num_nodes + obj2
    adj_mod = jnp.zeros((num_nodes, num_relations * num_nodes),
                        jnp.float32).at[fr2, to2].add(vals2)

    x_q = features.astype(jnp.bfloat16).astype(jnp.float32)
    w_q = weights.astype(jnp.bfloat16).astype(jnp.float32)
    adj_q = adj_mod.astype(jnp.bfloat16).astype(jnp.float32)
    with jax.default_matmul_precision("float32"):
        fw_ref = jnp.einsum("ni,rio->rno", x_q, w_q)
        fw_ref_q = fw_ref.astype(jnp.bfloat16).astype(jnp.float32)
        lin = adj_q @ fw_ref_q.reshape(num_relations * num_nodes, out_dim)
    ref = jnp.where(lin > 0, lin, jnp.expm1(lin))

    # NaNs (0/0 normalisation of the reference source) propagate identically in
    # kernel and reference -> equal_nan=True.
    assert bool(jnp.allclose(out, ref, rtol=1e-2, atol=1e-2, equal_nan=True)), (
        "Pallas output does not match the JAX reference")

    print("KERNEL_OK")
</pallas_src>

<mosaic_0001>
module attributes {stable_mosaic.version = 11 : i64} {
  func.func @_xw_kernel(%arg0: i32, %arg1: i32, %arg2: memref<16x128xbf16, #tpu.memory_space<vmem>>, %arg3: memref<128x896xbf16, #tpu.memory_space<vmem>>, %arg4: memref<16x896xbf16, #tpu.memory_space<vmem>>) attributes {dimension_semantics = [#tpu.dimension_semantics<parallel>, #tpu.dimension_semantics<parallel>], iteration_bounds = array<i64: 1, 1>, scalar_prefetch = 0 : i64, scratch_operands = 0 : i64, tpu.core_type = #tpu.core_type<tc>, window_params = [{transform_indices = @transform_0, window_bounds = array<i64: 16, 128>}, {transform_indices = @transform_1, window_bounds = array<i64: 128, 896>}, {transform_indices = @transform_2, window_bounds = array<i64: 16, 896>}]} {
    %c0 = arith.constant 0 : index
    %c0_0 = arith.constant 0 : index
    %0 = vector.load %arg2[%c0, %c0_0] : memref<16x128xbf16, #tpu.memory_space<vmem>>, vector<16x128xbf16>
    %c0_1 = arith.constant 0 : index
    %c0_2 = arith.constant 0 : index
    %1 = vector.load %arg3[%c0_1, %c0_2] : memref<128x896xbf16, #tpu.memory_space<vmem>>, vector<128x896xbf16>
    %cst = arith.constant dense<0.000000e+00> : vector<16x896xf32>
    %2 = tpu.matmul %0, %1, %cst {dimension_numbers = #tpu.dot_dimension_numbers<[1], [0], [0], [1], [0, 0, 1, 1], [], []>} : vector<16x128xbf16>, vector<128x896xbf16>, vector<16x896xf32> -> vector<16x896xf32>
    %3 = arith.truncf %2 : vector<16x896xf32> to vector<16x896xbf16>
    %c0_3 = arith.constant 0 : index
    %c0_4 = arith.constant 0 : index
    %4 = vector.load %arg4[%c0_3, %c0_4] : memref<16x896xbf16, #tpu.memory_space<vmem>>, vector<16x896xbf16>
    tpu.vector_store %arg4[%c0_3, %c0_4], %3 {strides = array<i32>} : memref<16x896xbf16, #tpu.memory_space<vmem>>, vector<16x896xbf16>,
    return
  }
  func.func @transform_0(%arg0: i32, %arg1: i32) -> (i32, i32) {
    %c0_i32 = arith.constant 0 : i32
    %c0_i32_0 = arith.constant 0 : i32
    return %arg0, %c0_i32 : i32, i32
  }
  func.func @transform_1(%arg0: i32, %arg1: i32) -> (i32, i32) {
    %c0_i32 = arith.constant 0 : i32
    %c0_i32_0 = arith.constant 0 : i32
    return %c0_i32, %arg1 : i32, i32
  }
  func.func @transform_2(%arg0: i32, %arg1: i32) -> (i32, i32) {
    %c0_i32 = arith.constant 0 : i32
    return %arg0, %arg1 : i32, i32
  }
}

</mosaic_0001>

<llo_original>
// kernel: tpu_custom_call.1
$region0: #{tpu_custom_call.1}
  #allocation0 [shape = 'u32[]', space=smem, size = 0x4, offset = 0x4, fixed_abs, tag = 'smem constant byte address 0x4 - core index']
  #allocation1 [shape = 'u32[144,128]{1,0:T(1,128)}', space=vmem, size = 0x12000, scoped, tag = 'internal scratch']
  %s0 = inlined_call_operand.hbm [shape: bf16[16,128], index: 0, kind: input, shape index: {}]
  %s1 = inlined_call_operand.hbm [shape: bf16[128,896], index: 1, kind: input, shape index: {}]
  %s2 = inlined_call_operand.hbm [shape: bf16[16,896], index: 2, kind: output, shape index: {}]
  %s3 = sld [smem:[#allocation0]]
  $region26: #{tpu_custom_call.1} parent=0
    _
  %s5 = ssub.s32 1, %s3
  %s6 = scalar_select 0, %s5, %s3
  $region1: #{tpu_custom_call.1} parent=0
    #allocation2 [shape = 'u8[4096]{0}', space=vmem, size = 0x1000, scoped, tag = 'input window, operand 0, single buffered']
    #allocation3 [shape = 's32[1]{0}', space=sflag, size = 0x4, scoped, tag = 'scoped memory for tpu_custom_call.1']
    #allocation4 [shape = 's32[1]{0}', space=sflag, size = 0x4, scoped, tag = 'scoped memory for tpu_custom_call.1']
    #allocation5 [shape = 'u8[229376]{0}', space=vmem, size = 0x38000, scoped, tag = 'input window, operand 1, single buffered']
    #allocation6 [shape = 's32[1]{0}', space=sflag, size = 0x4, scoped, tag = 'scoped memory for tpu_custom_call.1']
    #allocation7 [shape = 'u8[28672]{0}', space=vmem, size = 0x7000, scoped, tag = 'output window, operand 0, single buffered']
    %7 = vsyncpa [#allocation3], 0
    %8 = vsyncpa [#allocation6], 0
    %9 = vsyncpa [#allocation4], 0
    // Predicated region
    $region2: #{tpu_custom_call.1} parent=1 // pred_check
      _
    $region3: #{tpu_custom_call.1} parent=1 // pred_check_branch
      %11 = sbr.rel (0) target = $region5
    $region4: #{tpu_custom_call.1} parent=1 // pred_region
      %s13 = ssub.s32 128, 128
      %14 = vsyncadd [#allocation3], %s13
      %s15 = sshll.u32 [#allocation2], 4
      %s16 = int_to_ptr.vmem [resolvable:$true] %s15
      %21 = dma.hbm_to_vmem [thread:$0]  %s0, 128, %s16, [#allocation3], 64, 64, 4
    $region5: #{tpu_custom_call.1} parent=1 // pred_fallthru
      _
    // Predicated region
    $region6: #{tpu_custom_call.1} parent=1 // pred_check
      _
    $region7: #{tpu_custom_call.1} parent=1 // pred_check_branch
      %23 = sbr.rel (0) target = $region9
    $region8: #{tpu_custom_call.1} parent=1 // pred_region
      %s25 = ssub.s32 7168, 7168
      %26 = vsyncadd [#allocation6], %s25
      %s27 = sshll.u32 [#allocation5], 4
      %s28 = int_to_ptr.vmem [resolvable:$true] %s27
      %33 = dma.hbm_to_vmem [thread:$0]  %s1, 7168, %s28, [#allocation6], 448, 448, 28
    $region9: #{tpu_custom_call.1} parent=1 // pred_fallthru
      _
    // Predicated region
    $region10: #{tpu_custom_call.1} parent=1 // pred_check
      _
    $region11: #{tpu_custom_call.1} parent=1 // pred_check_branch
      %35 = sbr.rel (0) target = $region13
    $region12: #{tpu_custom_call.1} parent=1 // pred_region
      %36 = dma.done [#allocation3], 128
    $region13: #{tpu_custom_call.1} parent=1 // pred_fallthru
      _
    // Predicated region
    $region14: #{tpu_custom_call.1} parent=1 // pred_check
      _
    $region15: #{tpu_custom_call.1} parent=1 // pred_check_branch
      %38 = sbr.rel (0) target = $region17
    $region16: #{tpu_custom_call.1} parent=1 // pred_region
      %39 = dma.done [#allocation6], 7168
    $region17: #{tpu_custom_call.1} parent=1 // pred_fallthru
      _
    %v41 = vld [vmem:[#allocation2] sm:$0xf]
    %v42 = vld [vmem:[#allocation2 + $0x4] sm:$0xf]
    %v43 = vld [vmem:[#allocation5] sm:$0xff]
    %v44 = vld [vmem:[#allocation5 + $0x8] sm:$0xff]
    %v45 = vld [vmem:[#allocation5 + $0x10] sm:$0xff]
    %v46 = vld [vmem:[#allocation5 + $0x18] sm:$0xf]
    %v47 = vld [vmem:[#allocation5 + $0x1c] sm:$0xff]
    %v48 = vld [vmem:[#allocation5 + $0x24] sm:$0xff]
    %v49 = vld [vmem:[#allocation5 + $0x2c] sm:$0xff]
    %v50 = vld [vmem:[#allocation5 + $0x34] sm:$0xf]
    %v51 = vld [vmem:[#allocation5 + $0x38] sm:$0xff]
    %v52 = vld [vmem:[#allocation5 + $0x40] sm:$0xff]
    %v53 = vld [vmem:[#allocation5 + $0x48] sm:$0xff]
    %v54 = vld [vmem:[#allocation5 + $0x50] sm:$0xf]
    %v55 = vld [vmem:[#allocation5 + $0x54] sm:$0xff]
    %v56 = vld [vmem:[#allocation5 + $0x5c] sm:$0xff]
    %v57 = vld [vmem:[#allocation5 + $0x64] sm:$0xff]
    %v58 = vld [vmem:[#allocation5 + $0x6c] sm:$0xf]
    %v59 = vld [vmem:[#allocation5 + $0x70] sm:$0xff]
    %v60 = vld [vmem:[#allocation5 + $0x78] sm:$0xff]
    %v61 = vld [vmem:[#allocation5 + $0x80] sm:$0xff]
    %v62 = vld [vmem:[#allocation5 + $0x88] sm:$0xf]
    %v63 = vld [vmem:[#allocation5 + $0x8c] sm:$0xff]
    %v64 = vld [vmem:[#allocation5 + $0x94] sm:$0xff]
    %v65 = vld [vmem:[#allocation5 + $0x9c] sm:$0xff]
    %v66 = vld [vmem:[#allocation5 + $0xa4] sm:$0xf]
    %v67 = vld [vmem:[#allocation5 + $0xa8] sm:$0xff]
    %v68 = vld [vmem:[#allocation5 + $0xb0] sm:$0xff]
    %v69 = vld [vmem:[#allocation5 + $0xb8] sm:$0xff]
    %v70 = vld [vmem:[#allocation5 + $0xc0] sm:$0xf]
    %v71 = vld [vmem:[#allocation5 + $0xc4] sm:$0xff]
    %v72 = vld [vmem:[#allocation5 + $0xcc] sm:$0xff]
    %v73 = vld [vmem:[#allocation5 + $0xd4] sm:$0xff]
    %v74 = vld [vmem:[#allocation5 + $0xdc] sm:$0xf]
    %v75 = vld [vmem:[#allocation5 + $0xe0] sm:$0xff]
    %v76 = vld [vmem:[#allocation5 + $0xe8] sm:$0xff]
    %v77 = vld [vmem:[#allocation5 + $0xf0] sm:$0xff]
    %v78 = vld [vmem:[#allocation5 + $0xf8] sm:$0xf]
    %v79 = vld [vmem:[#allocation5 + $0xfc] sm:$0xff]
    %v80 = vld [vmem:[#allocation5 + $0x104] sm:$0xff]
    %v81 = vld [vmem:[#allocation5 + $0x10c] sm:$0xff]
    %v82 = vld [vmem:[#allocation5 + $0x114] sm:$0xf]
    %v83 = vld [vmem:[#allocation5 + $0x118] sm:$0xff]
    %v84 = vld [vmem:[#allocation5 + $0x120] sm:$0xff]
    %v85 = vld [vmem:[#allocation5 + $0x128] sm:$0xff]
    %v86 = vld [vmem:[#allocation5 + $0x130] sm:$0xf]
    %v87 = vld [vmem:[#allocation5 + $0x134] sm:$0xff]
    %v88 = vld [vmem:[#allocation5 + $0x13c] sm:$0xff]
    %v89 = vld [vmem:[#allocation5 + $0x144] sm:$0xff]
    %v90 = vld [vmem:[#allocation5 + $0x14c] sm:$0xf]
    %v91 = vld [vmem:[#allocation5 + $0x150] sm:$0xff]
    %v92 = vld [vmem:[#allocation5 + $0x158] sm:$0xff]
    %v93 = vld [vmem:[#allocation5 + $0x160] sm:$0xff]
    %v94 = vld [vmem:[#allocation5 + $0x168] sm:$0xf]
    %v95 = vld [vmem:[#allocation5 + $0x16c] sm:$0xff]
    %v96 = vld [vmem:[#allocation5 + $0x174] sm:$0xff]
    %v97 = vld [vmem:[#allocation5 + $0x17c] sm:$0xff]
    %v98 = vld [vmem:[#allocation5 + $0x184] sm:$0xf]
    %v99 = vld [vmem:[#allocation5 + $0x188] sm:$0xff]
    %v100 = vld [vmem:[#allocation5 + $0x190] sm:$0xff]
    %v101 = vld [vmem:[#allocation5 + $0x198] sm:$0xff]
    %v102 = vld [vmem:[#allocation5 + $0x1a0] sm:$0xf]
    %v103 = vld [vmem:[#allocation5 + $0x1a4] sm:$0xff]
    %v104 = vld [vmem:[#allocation5 + $0x1ac] sm:$0xff]
    %v105 = vld [vmem:[#allocation5 + $0x1b4] sm:$0xff]
    %v106 = vld [vmem:[#allocation5 + $0x1bc] sm:$0xf]
    %v109 = vunpack.c.l.b16 %v41
    %v110 = vunpack.c.l.b16 %v42
    %v111 = vpack.c.b16 %v110, %v109
    %v177 = vunpack.c.l.b16 %v43
    %v178 = vunpack.c.h.b16 %v43
    %v179 = vunpack.c.l.b16 %v44
    %v180 = vunpack.c.h.b16 %v44
    %v181 = vunpack.c.l.b16 %v45
    %v182 = vunpack.c.h.b16 %v45
    %v183 = vunpack.c.l.b16 %v46
    %v184 = vunpack.c.l.b16 %v47
    %v185 = vunpack.c.h.b16 %v47
    %v186 = vunpack.c.l.b16 %v48
    %v187 = vunpack.c.h.b16 %v48
    %v188 = vunpack.c.l.b16 %v49
    %v189 = vunpack.c.h.b16 %v49
    %v190 = vunpack.c.l.b16 %v50
    %v191 = vunpack.c.l.b16 %v51
    %v192 = vunpack.c.h.b16 %v51
    %v193 = vunpack.c.l.b16 %v52
    %v194 = vunpack.c.h.b16 %v52
    %v195 = vunpack.c.l.b16 %v53
    %v196 = vunpack.c.h.b16 %v53
    %v197 = vunpack.c.l.b16 %v54
    %v198 = vunpack.c.l.b16 %v55
    %v199 = vunpack.c.h.b16 %v55
    %v200 = vunpack.c.l.b16 %v56
    %v201 = vunpack.c.h.b16 %v56
    %v202 = vunpack.c.l.b16 %v57
    %v203 = vunpack.c.h.b16 %v57
    %v204 = vunpack.c.l.b16 %v58
    %v205 = vunpack.c.l.b16 %v59
    %v206 = vunpack.c.h.b16 %v59
    %v207 = vunpack.c.l.b16 %v60
    %v208 = vunpack.c.h.b16 %v60
    %v209 = vunpack.c.l.b16 %v61
    %v210 = vunpack.c.h.b16 %v61
    %v211 = vunpack.c.l.b16 %v62
    %v212 = vunpack.c.l.b16 %v63
    %v213 = vunpack.c.h.b16 %v63
    %v214 = vunpack.c.l.b16 %v64
    %v215 = vunpack.c.h.b16 %v64
    %v216 = vunpack.c.l.b16 %v65
    %v217 = vunpack.c.h.b16 %v65
    %v218 = vunpack.c.l.b16 %v66
    %v219 = vunpack.c.l.b16 %v67
    %v220 = vunpack.c.h.b16 %v67
    %v221 = vunpack.c.l.b16 %v68
    %v222 = vunpack.c.h.b16 %v68
    %v223 = vunpack.c.l.b16 %v69
    %v224 = vunpack.c.h.b16 %v69
    %v225 = vunpack.c.l.b16 %v70
    %v226 = vunpack.c.l.b16 %v71
    %v227 = vunpack.c.h.b16 %v71
    %v228 = vunpack.c.l.b16 %v72
    %v229 = vunpack.c.h.b16 %v72
    %v230 = vunpack.c.l.b16 %v73
    %v231 = vunpack.c.h.b16 %v73
    %v232 = vunpack.c.l.b16 %v74
    %v233 = vunpack.c.l.b16 %v75
    %v234 = vunpack.c.h.b16 %v75
    %v235 = vunpack.c.l.b16 %v76
    %v236 = vunpack.c.h.b16 %v76
    %v237 = vunpack.c.l.b16 %v77
    %v238 = vunpack.c.h.b16 %v77
    %v239 = vunpack.c.l.b16 %v78
    %v240 = vunpack.c.l.b16 %v79
    %v241 = vunpack.c.h.b16 %v79
    %v242 = vunpack.c.l.b16 %v80
    %v243 = vunpack.c.h.b16 %v80
    %v244 = vunpack.c.l.b16 %v81
    %v245 = vunpack.c.h.b16 %v81
    %v246 = vunpack.c.l.b16 %v82
    %v247 = vunpack.c.l.b16 %v83
    %v248 = vunpack.c.h.b16 %v83
    %v249 = vunpack.c.l.b16 %v84
    %v250 = vunpack.c.h.b16 %v84
    %v251 = vunpack.c.l.b16 %v85
    %v252 = vunpack.c.h.b16 %v85
    %v253 = vunpack.c.l.b16 %v86
    %v254 = vunpack.c.l.b16 %v87
    %v255 = vunpack.c.h.b16 %v87
    %v256 = vunpack.c.l.b16 %v88
    %v257 = vunpack.c.h.b16 %v88
    %v258 = vunpack.c.l.b16 %v89
    %v259 = vunpack.c.h.b16 %v89
    %v260 = vunpack.c.l.b16 %v90
    %v261 = vunpack.c.l.b16 %v91
    %v262 = vunpack.c.h.b16 %v91
    %v263 = vunpack.c.l.b16 %v92
    %v264 = vunpack.c.h.b16 %v92
    %v265 = vunpack.c.l.b16 %v93
    %v266 = vunpack.c.h.b16 %v93
    %v267 = vunpack.c.l.b16 %v94
    %v268 = vunpack.c.l.b16 %v95
    %v269 = vunpack.c.h.b16 %v95
    %v270 = vunpack.c.l.b16 %v96
    %v271 = vunpack.c.h.b16 %v96
    %v272 = vunpack.c.l.b16 %v97
    %v273 = vunpack.c.h.b16 %v97
    %v274 = vunpack.c.l.b16 %v98
    %v275 = vunpack.c.l.b16 %v99
    %v276 = vunpack.c.h.b16 %v99
    %v277 = vunpack.c.l.b16 %v100
    %v278 = vunpack.c.h.b16 %v100
    %v279 = vunpack.c.l.b16 %v101
    %v280 = vunpack.c.h.b16 %v101
    %v281 = vunpack.c.l.b16 %v102
    %v282 = vunpack.c.l.b16 %v103
    %v283 = vunpack.c.h.b16 %v103
    %v284 = vunpack.c.l.b16 %v104
    %v285 = vunpack.c.h.b16 %v104
    %v286 = vunpack.c.l.b16 %v105
    %v287 = vunpack.c.h.b16 %v105
    %v288 = vunpack.c.l.b16 %v106
    %v289 = vpack.c.b16 %v184, %v177
    %v290 = vpack.c.b16 %v185, %v178
    %v291 = vpack.c.b16 %v186, %v179
    %v292 = vpack.c.b16 %v187, %v180
    %v293 = vpack.c.b16 %v188, %v181
    %v294 = vpack.c.b16 %v189, %v182
    %v295 = vpack.c.b16 %v190, %v183
    %v296 = vpack.c.b16 %v198, %v191
    %v297 = vpack.c.b16 %v199, %v192
    %v298 = vpack.c.b16 %v200, %v193
    %v299 = vpack.c.b16 %v201, %v194
    %v300 = vpack.c.b16 %v202, %v195
    %v301 = vpack.c.b16 %v203, %v196
    %v302 = vpack.c.b16 %v204, %v197
    %v303 = vpack.c.b16 %v212, %v205
    %v304 = vpack.c.b16 %v213, %v206
    %v305 = vpack.c.b16 %v214, %v207
    %v306 = vpack.c.b16 %v215, %v208
    %v307 = vpack.c.b16 %v216, %v209
    %v308 = vpack.c.b16 %v217, %v210
    %v309 = vpack.c.b16 %v218, %v211
    %v310 = vpack.c.b16 %v226, %v219
    %v311 = vpack.c.b16 %v227, %v220
    %v312 = vpack.c.b16 %v228, %v221
    %v313 = vpack.c.b16 %v229, %v222
    %v314 = vpack.c.b16 %v230, %v223
    %v315 = vpack.c.b16 %v231, %v224
    %v316 = vpack.c.b16 %v232, %v225
    %v317 = vpack.c.b16 %v240, %v233
    %v318 = vpack.c.b16 %v241, %v234
    %v319 = vpack.c.b16 %v242, %v235
    %v320 = vpack.c.b16 %v243, %v236
    %v321 = vpack.c.b16 %v244, %v237
    %v322 = vpack.c.b16 %v245, %v238
    %v323 = vpack.c.b16 %v246, %v239
    %v324 = vpack.c.b16 %v254, %v247
    %v325 = vpack.c.b16 %v255, %v248
    %v326 = vpack.c.b16 %v256, %v249
    %v327 = vpack.c.b16 %v257, %v250
    %v328 = vpack.c.b16 %v258, %v251
    %v329 = vpack.c.b16 %v259, %v252
    %v330 = vpack.c.b16 %v260, %v253
    %v331 = vpack.c.b16 %v268, %v261
    %v332 = vpack.c.b16 %v269, %v262
    %v333 = vpack.c.b16 %v270, %v263
    %v334 = vpack.c.b16 %v271, %v264
    %v335 = vpack.c.b16 %v272, %v265
    %v336 = vpack.c.b16 %v273, %v266
    %v337 = vpack.c.b16 %v274, %v267
    %v338 = vpack.c.b16 %v282, %v275
    %v339 = vpack.c.b16 %v283, %v276
    %v340 = vpack.c.b16 %v284, %v277
    %v341 = vpack.c.b16 %v285, %v278
    %v342 = vpack.c.b16 %v286, %v279
    %v343 = vpack.c.b16 %v287, %v280
    %v344 = vpack.c.b16 %v288, %v281
    %401 = vmatprep.subr.bf16.mxu0 %v290
    %402 = vmatpush1.bf16.msra.mxu0 %v289
    %403 = vmatprep.subr.bf16.mxu0 %v297
    %404 = vmatpush1.bf16.msra.mxu0 %v296
    %405 = vmatprep.subr.bf16.mxu0 %v304
    %406 = vmatpush1.bf16.msra.mxu0 %v303
    %407 = vmatprep.subr.bf16.mxu0 %v311
    %408 = vmatpush1.bf16.msra.mxu0 %v310
    %409 = vmatprep.subr.bf16.mxu0 %v318
    %410 = vmatpush1.bf16.msra.mxu0 %v317
    %411 = vmatprep.subr.bf16.mxu0 %v325
    %412 = vmatpush1.bf16.msra.mxu0 %v324
    %413 = vmatprep.subr.bf16.mxu0 %v332
    %414 = vmatpush1.bf16.msra.mxu0 %v331
    %415 = vmatprep.subr.bf16.mxu0 %v339
    %416 = vmatpush1.bf16.msra.mxu0 %v338
    %417 = vmatprep.subr.bf16.mxu0 0
    %418 = vmatpush1.bf16.msra.mxu0 0
    %419 = vmatprep.subr.bf16.mxu0 0
    %420 = vmatpush1.bf16.msra.mxu0 0
    %421 = vmatprep.subr.bf16.mxu0 0
    %422 = vmatpush1.bf16.msra.mxu0 0
    %423 = vmatprep.subr.bf16.mxu0 0
    %424 = vmatpush1.bf16.msra.mxu0 0
    %425 = vmatprep.subr.bf16.mxu0 0
    %426 = vmatpush1.bf16.msra.mxu0 0
    %427 = vmatprep.subr.bf16.mxu0 0
    %428 = vmatpush1.bf16.msra.mxu0 0
    %429 = vmatprep.subr.bf16.mxu0 0
    %430 = vmatpush1.bf16.msra.mxu0 0
    %431 = vmatprep.subr.bf16.mxu0 0
    %432 = vmatpush1.bf16.msra.mxu0 0
    %433 = vmatprep.mubr.bf16.mxu0 0
    %434 = vmatmul.mubr.bf16.gmra.mrb[0].mxu0 %v111
    %v435 = vpop.f32.mrb[0].mxu0
    %v436 = vadd.f32 0.0, %v435
    %v437 = vpop.f32.mrb[0].mxu0
    %v438 = vadd.f32 0.0, %v437
    %v439 = vpop.f32.mrb[0].mxu0
    %v440 = vadd.f32 0.0, %v439
    %v441 = vpop.f32.mrb[0].mxu0
    %v442 = vadd.f32 0.0, %v441
    %443 = vdwg.mxu0
    %444 = vmatprep.subr.bf16.mxu0 %v292
    %445 = vmatpush1.bf16.msra.mxu0 %v291
    %446 = vmatprep.subr.bf16.mxu0 %v299
    %447 = vmatpush1.bf16.msra.mxu0 %v298
    %448 = vmatprep.subr.bf16.mxu0 %v306
    %449 = vmatpush1.bf16.msra.mxu0 %v305
    %450 = vmatprep.subr.bf16.mxu0 %v313
    %451 = vmatpush1.bf16.msra.mxu0 %v312
    %452 = vmatprep.subr.bf16.mxu0 %v320
    %453 = vmatpush1.bf16.msra.mxu0 %v319
    %454 = vmatprep.subr.bf16.mxu0 %v327
    %455 = vmatpush1.bf16.msra.mxu0 %v326
    %456 = vmatprep.subr.bf16.mxu0 %v334
    %457 = vmatpush1.bf16.msra.mxu0 %v333
    %458 = vmatprep.subr.bf16.mxu0 %v341
    %459 = vmatpush1.bf16.msra.mxu0 %v340
    %460 = vmatprep.subr.bf16.mxu0 0
    %461 = vmatpush1.bf16.msra.mxu0 0
    %462 = vmatprep.subr.bf16.mxu0 0
    %463 = vmatpush1.bf16.msra.mxu0 0
    %464 = vmatprep.subr.bf16.mxu0 0
    %465 = vmatpush1.bf16.msra.mxu0 0
    %466 = vmatprep.subr.bf16.mxu0 0
    %467 = vmatpush1.bf16.msra.mxu0 0
    %468 = vmatprep.subr.bf16.mxu0 0
    %469 = vmatpush1.bf16.msra.mxu0 0
    %470 = vmatprep.subr.bf16.mxu0 0
    %471 = vmatpush1.bf16.msra.mxu0 0
    %472 = vmatprep.subr.bf16.mxu0 0
    %473 = vmatpush1.bf16.msra.mxu0 0
    %474 = vmatprep.subr.bf16.mxu0 0
    %475 = vmatpush1.bf16.msra.mxu0 0
    %476 = vmatprep.mubr.bf16.mxu0 0
    %477 = vmatmul.mubr.bf16.gmra.mrb[0].mxu0 %v111
    %v478 = vpop.f32.mrb[0].mxu0
    %v479 = vadd.f32 0.0, %v478
    %v480 = vpop.f32.mrb[0].mxu0
    %v481 = vadd.f32 0.0, %v480
    %v482 = vpop.f32.mrb[0].mxu0
    %v483 = vadd.f32 0.0, %v482
    %v484 = vpop.f32.mrb[0].mxu0
    %v485 = vadd.f32 0.0, %v484
    %486 = vdwg.mxu0
    %487 = vmatprep.subr.bf16.mxu0 %v294
    %488 = vmatpush1.bf16.msra.mxu0 %v293
    %489 = vmatprep.subr.bf16.mxu0 %v301
    %490 = vmatpush1.bf16.msra.mxu0 %v300
    %491 = vmatprep.subr.bf16.mxu0 %v308
    %492 = vmatpush1.bf16.msra.mxu0 %v307
    %493 = vmatprep.subr.bf16.mxu0 %v315
    %494 = vmatpush1.bf16.msra.mxu0 %v314
    %495 = vmatprep.subr.bf16.mxu0 %v322
    %496 = vmatpush1.bf16.msra.mxu0 %v321
    %497 = vmatprep.subr.bf16.mxu0 %v329
    %498 = vmatpush1.bf16.msra.mxu0 %v328
    %499 = vmatprep.subr.bf16.mxu0 %v336
    %500 = vmatpush1.bf16.msra.mxu0 %v335
    %501 = vmatprep.subr.bf16.mxu0 %v343
    %502 = vmatpush1.bf16.msra.mxu0 %v342
    %503 = vmatprep.subr.bf16.mxu0 0
    %504 = vmatpush1.bf16.msra.mxu0 0
    %505 = vmatprep.subr.bf16.mxu0 0
    %506 = vmatpush1.bf16.msra.mxu0 0
    %507 = vmatprep.subr.bf16.mxu0 0
    %508 = vmatpush1.bf16.msra.mxu0 0
    %509 = vmatprep.subr.bf16.mxu0 0
    %510 = vmatpush1.bf16.msra.mxu0 0
    %511 = vmatprep.subr.bf16.mxu0 0
    %512 = vmatpush1.bf16.msra.mxu0 0
    %513 = vmatprep.subr.bf16.mxu0 0
    %514 = vmatpush1.bf16.msra.mxu0 0
    %515 = vmatprep.subr.bf16.mxu0 0
    %516 = vmatpush1.bf16.msra.mxu0 0
    %517 = vmatprep.subr.bf16.mxu0 0
    %518 = vmatpush1.bf16.msra.mxu0 0
    %519 = vmatprep.mubr.bf16.mxu0 0
    %520 = vmatmul.mubr.bf16.gmra.mrb[0].mxu0 %v111
    %v521 = vpop.f32.mrb[0].mxu0
    %v522 = vadd.f32 0.0, %v521
    %v523 = vpop.f32.mrb[0].mxu0
    %v524 = vadd.f32 0.0, %v523
    %v525 = vpop.f32.mrb[0].mxu0
    %v526 = vadd.f32 0.0, %v525
    %v527 = vpop.f32.mrb[0].mxu0
    %v528 = vadd.f32 0.0, %v527
    %529 = vdwg.mxu0
    %530 = vmatprep.subr.bf16.mxu0 0
    %531 = vmatpush1.bf16.msra.mxu0 %v295
    %532 = vmatprep.subr.bf16.mxu0 0
    %533 = vmatpush1.bf16.msra.mxu0 %v302
    %534 = vmatprep.subr.bf16.mxu0 0
    %535 = vmatpush1.bf16.msra.mxu0 %v309
    %536 = vmatprep.subr.bf16.mxu0 0
    %537 = vmatpush1.bf16.msra.mxu0 %v316
    %538 = vmatprep.subr.bf16.mxu0 0
    %539 = vmatpush1.bf16.msra.mxu0 %v323
    %540 = vmatprep.subr.bf16.mxu0 0
    %541 = vmatpush1.bf16.msra.mxu0 %v330
    %542 = vmatprep.subr.bf16.mxu0 0
    %543 = vmatpush1.bf16.msra.mxu0 %v337
    %544 = vmatprep.subr.bf16.mxu0 0
    %545 = vmatpush1.bf16.msra.mxu0 %v344
    %546 = vmatprep.subr.bf16.mxu0 0
    %547 = vmatpush1.bf16.msra.mxu0 0
    %548 = vmatprep.subr.bf16.mxu0 0
    %549 = vmatpush1.bf16.msra.mxu0 0
    %550 = vmatprep.subr.bf16.mxu0 0
    %551 = vmatpush1.bf16.msra.mxu0 0
    %552 = vmatprep.subr.bf16.mxu0 0
    %553 = vmatpush1.bf16.msra.mxu0 0
    %554 = vmatprep.subr.bf16.mxu0 0
    %555 = vmatpush1.bf16.msra.mxu0 0
    %556 = vmatprep.subr.bf16.mxu0 0
    %557 = vmatpush1.bf16.msra.mxu0 0
    %558 = vmatprep.subr.bf16.mxu0 0
    %559 = vmatpush1.bf16.msra.mxu0 0
    %560 = vmatprep.subr.bf16.mxu0 0
    %561 = vmatpush1.bf16.msra.mxu0 0
    %562 = vmatprep.mubr.bf16.mxu0 0
    %563 = vmatmul.mubr.bf16.gmra.mrb[0].mxu0 %v111
    %v564 = vpop.f32.mrb[0].mxu0
    %v565 = vadd.f32 0.0, %v564
    %v566 = vpop.f32.mrb[0].mxu0
    %v567 = vpop.f32.mrb[0].mxu0
    %v568 = vadd.f32 0.0, %v567
    %v569 = vpop.f32.mrb[0].mxu0
    %570 = vdwg.mxu0
    %v571 = vpack.c.bf16 %v440, %v436
    %v572 = vpack.c.bf16 %v442, %v438
    %v573 = vpack.c.bf16 %v483, %v479
    %v574 = vpack.c.bf16 %v485, %v481
    %v575 = vpack.c.bf16 %v526, %v522
    %v576 = vpack.c.bf16 %v528, %v524
    %v577 = vpack.c.bf16 %v568, %v565
    %v585 = vunpack.c.l.b16 %v571
    %v586 = vunpack.c.l.b16 %v572
    %v587 = vunpack.c.l.b16 %v573
    %v588 = vunpack.c.l.b16 %v574
    %v589 = vunpack.c.l.b16 %v575
    %v590 = vunpack.c.l.b16 %v576
    %v591 = vunpack.c.l.b16 %v577
    %v592 = vunpack.c.h.b16 %v571
    %v593 = vunpack.c.h.b16 %v572
    %v594 = vunpack.c.h.b16 %v573
    %v595 = vunpack.c.h.b16 %v574
    %v596 = vunpack.c.h.b16 %v575
    %v597 = vunpack.c.h.b16 %v576
    %v598 = vunpack.c.h.b16 %v577
    %v599 = vpack.c.b16 %v586, %v585
    %v600 = vpack.c.b16 %v588, %v587
    %v601 = vpack.c.b16 %v590, %v589
    %v602 = vpack.c.b16 %v591, %v591
    %v603 = vpack.c.b16 %v593, %v592
    %v604 = vpack.c.b16 %v595, %v594
    %v605 = vpack.c.b16 %v597, %v596
    %v606 = vpack.c.b16 %v598, %v598
    %615 = vst [vmem:[#allocation7] sm:$0xff] %v599
    %616 = vst [vmem:[#allocation7 + $0x8] sm:$0xff] %v600
    %617 = vst [vmem:[#allocation7 + $0x10] sm:$0xff] %v601
    %618 = vst [vmem:[#allocation7 + $0x18] sm:$0xf] %v602
    %619 = vst [vmem:[#allocation7 + $0x1c] sm:$0xff] %v603
    %620 = vst [vmem:[#allocation7 + $0x24] sm:$0xff] %v604
    %621 = vst [vmem:[#allocation7 + $0x2c] sm:$0xff] %v605
    %622 = vst [vmem:[#allocation7 + $0x34] sm:$0xf] %v606
    // Predicated region
    $region18: #{tpu_custom_call.1} parent=1 // pred_check
      _
    $region19: #{tpu_custom_call.1} parent=1 // pred_check_branch
      %624 = sbr.rel (0) target = $region21
    $region20: #{tpu_custom_call.1} parent=1 // pred_region
      %s626 = ssub.s32 896, 896
      %627 = vsyncadd [#allocation4], %s626
      %s628 = sshll.u32 [#allocation7], 4
      %s629 = int_to_ptr.vmem [resolvable:$true] %s628
      %634 = dma.vmem_to_hbm [thread:$0]  %s629, 896, %s2, [#allocation4], 448, 448, 28
    $region21: #{tpu_custom_call.1} parent=1 // pred_fallthru
      _
    // Predicated region
    $region22: #{tpu_custom_call.1} parent=1 // pred_check
      _
    $region23: #{tpu_custom_call.1} parent=1 // pred_check_branch
      %636 = sbr.rel (0) target = $region25
    $region24: #{tpu_custom_call.1} parent=1 // pred_region
      %637 = dma.done [#allocation4], 896
    $region25: #{tpu_custom_call.1} parent=1 // pred_fallthru
      _
    %638 = vsyncpa [#allocation3], 1
    %639 = vsyncpa [#allocation6], 1
    %640 = vsyncpa [#allocation4], 1

</llo_original>
